<compile_context>
chip_gen: v6e
topology: v6e:2x2x1
jax: 0.10.0
libtpu: 0.0.40
codegen_flags: <defaults>
</compile_context>

<pallas_src>
import jax
import jax.numpy as jnp
from jax.experimental import pallas as pl
from jax.experimental.pallas import tpu as pltpu


def _round_up(n, m):
    return ((n + m - 1) // m) * m


def _choose_tb(batch, d, block_b=None):
    """Pick the batch tile (rows of x per grid step)."""
    if block_b is None:
        # ~1 MiB of x per block; double-buffered -> ~2 MiB. Measured tile
        # sweeps put ~1 MiB tiles at ~85% of HBM roofline, and everything
        # (x dbuf + in-kernel xT/hT scratch + out dbuf) stays a few MiB,
        # far under v5e's 16 MiB default scoped VMEM.
        target_bytes = 1 << 20
        block_b = max(128, target_bytes // (d * 4))
    # Multiple of 128 keeps the x tile sublane-aligned and the lane-dense
    # output row a whole number of vregs; don't tile past the (rounded) batch.
    tb = _round_up(min(block_b, _round_up(batch, 128)), 128)
    return min(tb, 32768)


def _rule_nn_kernel(x_ref, w1_ref, w2_ref, b_ref, o_ref):
    # x_ref : [TB, D]   VMEM   batch tile (pipelined)
    # w1_ref: [R, D]    VMEM   'linear' weight, native PyTorch [out, in] (resident)
    # w2_ref: [R, 1]    VMEM   'out' weight as a column (resident)
    # b_ref : [1, 1]    SMEM   'out' bias (scalar)
    # o_ref : [1, 1, TB] VMEM  lane-dense output row for this tile
    x_t = x_ref[...].T                                        # (D, TB)  XLU transpose
    h_t = jnp.dot(w1_ref[...], x_t,
                  preferred_element_type=jnp.float32)         # (R, TB)  MXU
    # Second layer has a single output unit: VPU multiply + sublane reduce
    # instead of an N=1 matmul that wastes >99% of the MXU.
    y = jnp.sum(h_t * w2_ref[...], axis=0, keepdims=True) + b_ref[0, 0]   # (1, TB)
    o_ref[...] = jax.nn.sigmoid(y)[None].astype(o_ref.dtype)  # (1, 1, TB)


def one_hot_rule_nn_forward(x, w1, w2, b2, *, block_b=None):
    """Forward pass.

    x : [B, D] f32            input batch
    w1: [R, D] f32            'linear' weight (PyTorch [out, in] layout)
    w2: [1, R] f32            'out' weight   (PyTorch [out, in] layout)
    b2: [1]    f32            'out' bias
    returns [B, 1] f32 = sigmoid((x @ w1.T) @ w2.T + b2)
    """
    B, D = x.shape
    R, D2 = w1.shape
    assert D2 == D
    assert w2.shape == (1, R)
    assert b2.shape == (1,)

    w2_col = w2.T                 # (R, 1) column for the in-kernel broadcast
    b2_s = b2.reshape(1, 1)       # (1, 1) SMEM scalar

    tb = _choose_tb(B, D, block_b)
    grid_n = pl.cdiv(B, tb)

    out = pl.pallas_call(
        _rule_nn_kernel,
        out_shape=jax.ShapeDtypeStruct((grid_n, 1, tb), jnp.float32),
        grid_spec=pltpu.PrefetchScalarGridSpec(
            num_scalar_prefetch=0,
            grid=(grid_n,),
            in_specs=[
                # Batch-tiled activations: double-buffered DMA per grid step.
                pl.BlockSpec((tb, D), lambda i: (i, 0)),
                # Weights: constant block index -> fetched once, VMEM-resident.
                pl.BlockSpec((R, D), lambda i: (0, 0)),
                pl.BlockSpec((R, 1), lambda i: (0, 0)),
                # Scalar bias in SMEM (no VMEM pipeline slot, no broadcast DMA).
                pl.BlockSpec(memory_space=pltpu.MemorySpace.SMEM),
            ],
            # Lane-dense output: one (1, 1, tb) row per grid step.
            out_specs=pl.BlockSpec((1, 1, tb), lambda i: (i, 0, 0)),
        ),
        compiler_params=pltpu.CompilerParams(
            # Batch tiles are independent.
            dimension_semantics=("parallel",),
        ),
    )(x, w1, w2_col, b2_s)

    # (grid_n, 1, tb) row-major flatten -> row g*tb + t; drop pad rows.
    return out.reshape(grid_n * tb)[:B].reshape(B, 1)


def init_params(key, input_size, num_rules):
    """Deterministic init mimicking nn.Linear defaults (uniform +/- 1/sqrt(fan_in)),
    returned in native PyTorch layouts."""
    k1, k2, k3 = jax.random.split(key, 3)
    bound1 = 1.0 / jnp.sqrt(jnp.float32(input_size))
    bound2 = 1.0 / jnp.sqrt(jnp.float32(num_rules))
    w1 = jax.random.uniform(k1, (num_rules, input_size), jnp.float32,
                            minval=-bound1, maxval=bound1)
    w2 = jax.random.uniform(k2, (1, num_rules), jnp.float32,
                            minval=-bound2, maxval=bound2)
    b2 = jax.random.uniform(k3, (1,), jnp.float32,
                            minval=-bound2, maxval=bound2)
    return w1, w2, b2


def _reference(x, w1, w2, b2):
    return jax.nn.sigmoid((x @ w1.T) @ w2.T + b2)


if __name__ == "__main__":
    key = jax.random.PRNGKey(0)
    kx, kp, kx2 = jax.random.split(key, 3)

    batch = 8
    input_size = 32
    num_rules = 16

    x = jax.random.normal(kx, (batch, input_size), jnp.float32)
    w1, w2, b2 = init_params(kp, input_size, num_rules)

    out = one_hot_rule_nn_forward(x, w1, w2, b2)
    out = jax.block_until_ready(out)

    ref = _reference(x, w1, w2, b2)
    assert out.shape == (batch, 1)
    assert jnp.allclose(out, ref, atol=1e-5, rtol=1e-5), "mismatch vs reference (small)"

    # Second check: exercise the tiled / pipelined / lane-dense path with a
    # partial last tile (272 rows, 128-row tiles -> grid of 3, last tile ragged).
    batch2 = 272
    x2 = jax.random.normal(kx2, (batch2, input_size), jnp.float32)
    out2 = one_hot_rule_nn_forward(x2, w1, w2, b2, block_b=128)
    out2 = jax.block_until_ready(out2)
    ref2 = _reference(x2, w1, w2, b2)
    assert out2.shape == (batch2, 1)
    assert jnp.allclose(out2, ref2, atol=1e-5, rtol=1e-5), "mismatch vs reference (tiled)"

    print("KERNEL_OK")
</pallas_src>

<mosaic_0001>
module attributes {stable_mosaic.version = 11 : i64} {
  func.func @_rule_nn_kernel(%arg0: i32, %arg1: memref<128x32xf32, #tpu.memory_space<vmem>>, %arg2: memref<16x32xf32, #tpu.memory_space<vmem>>, %arg3: memref<16x1xf32, #tpu.memory_space<vmem>>, %arg4: memref<1x1xf32, #tpu.memory_space<smem>>, %arg5: memref<1x1x128xf32, #tpu.memory_space<vmem>>) attributes {dimension_semantics = [#tpu.dimension_semantics<parallel>], iteration_bounds = array<i64: 1>, scalar_prefetch = 0 : i64, scratch_operands = 0 : i64, tpu.core_type = #tpu.core_type<tc>, window_params = [{transform_indices = @transform_0, window_bounds = array<i64: 128, 32>}, {pipeline_mode = #tpu.pipeline_mode<synchronous>, transform_indices = @transform_1, window_bounds = array<i64: 16, 32>}, {pipeline_mode = #tpu.pipeline_mode<synchronous>, transform_indices = @transform_2, window_bounds = array<i64: 16, 1>}, {transform_indices = @transform_3, window_bounds = array<i64: 1, 1>}, {transform_indices = @transform_4, window_bounds = array<i64: 1, 1, 128>}]} {
    %c0 = arith.constant 0 : index
    %c0_0 = arith.constant 0 : index
    %0 = vector.load %arg1[%c0, %c0_0] : memref<128x32xf32, #tpu.memory_space<vmem>>, vector<128x32xf32>
    %1 = tpu.transpose %0, [1, 0] : vector<128x32xf32> -> vector<32x128xf32>
    %c0_1 = arith.constant 0 : index
    %c0_2 = arith.constant 0 : index
    %2 = vector.load %arg2[%c0_1, %c0_2] : memref<16x32xf32, #tpu.memory_space<vmem>>, vector<16x32xf32>
    %cst = arith.constant dense<0.000000e+00> : vector<16x128xf32>
    %3 = tpu.matmul %2, %1, %cst {dimension_numbers = #tpu.dot_dimension_numbers<[1], [0], [0], [1], [0, 0, 1, 1], [], []>} : vector<16x32xf32>, vector<32x128xf32>, vector<16x128xf32> -> vector<16x128xf32>
    %c0_3 = arith.constant 0 : index
    %c0_4 = arith.constant 0 : index
    %4 = vector.load %arg3[%c0_3, %c0_4] : memref<16x1xf32, #tpu.memory_space<vmem>>, vector<16x1xf32>
    %5 = vector.broadcast %4 : vector<16x1xf32> to vector<16x128xf32>
    %6 = arith.mulf %3, %5 : vector<16x128xf32>
    %cst_5 = arith.constant dense<0.000000e+00> : vector<128xf32>
    %7 = vector.multi_reduction <add>, %6, %cst_5 [0] : vector<16x128xf32> to vector<128xf32>
    %8 = vector.shape_cast %7 : vector<128xf32> to vector<1x128xf32>
    %c0_6 = arith.constant 0 : index
    %c0_7 = arith.constant 0 : index
    %9 = memref.load %arg4[%c0_6, %c0_7] : memref<1x1xf32, #tpu.memory_space<smem>>
    %10 = vector.broadcast %9 : f32 to vector<1x128xf32>
    %11 = arith.addf %8, %10 : vector<1x128xf32>
    %12 = arith.negf %11 : vector<1x128xf32>
    %13 = math.exp %12 : vector<1x128xf32>
    %cst_8 = arith.constant 1.000000e+00 : f32
    %14 = vector.broadcast %cst_8 : f32 to vector<1x128xf32>
    %15 = arith.addf %14, %13 : vector<1x128xf32>
    %16 = arith.divf %14, %15 : vector<1x128xf32>
    %17 = vector.shape_cast %16 : vector<1x128xf32> to vector<1x1x128xf32>
    %c0_9 = arith.constant 0 : index
    %c0_10 = arith.constant 0 : index
    %c0_11 = arith.constant 0 : index
    %18 = vector.load %arg5[%c0_9, %c0_10, %c0_11] : memref<1x1x128xf32, #tpu.memory_space<vmem>>, vector<1x1x128xf32>
    tpu.vector_store %arg5[%c0_9, %c0_10, %c0_11], %17 {strides = array<i32>} : memref<1x1x128xf32, #tpu.memory_space<vmem>>, vector<1x1x128xf32>,
    return
  }
  func.func @transform_0(%arg0: i32) -> (i32, i32) {
    %c0_i32 = arith.constant 0 : i32
    %c0_i32_0 = arith.constant 0 : i32
    return %arg0, %c0_i32 : i32, i32
  }
  func.func @transform_1(%arg0: i32) -> (i32, i32) {
    %c0_i32 = arith.constant 0 : i32
    %c0_i32_0 = arith.constant 0 : i32
    %c0_i32_1 = arith.constant 0 : i32
    return %c0_i32, %c0_i32_0 : i32, i32
  }
  func.func @transform_2(%arg0: i32) -> (i32, i32) {
    %c0_i32 = arith.constant 0 : i32
    %c0_i32_0 = arith.constant 0 : i32
    %c0_i32_1 = arith.constant 0 : i32
    return %c0_i32, %c0_i32_0 : i32, i32
  }
  func.func @transform_3(%arg0: i32) -> (i32, i32) {
    %c0_i32 = arith.constant 0 : i32
    %c0_i32_0 = arith.constant 0 : i32
    %c0_i32_1 = arith.constant 0 : i32
    return %c0_i32, %c0_i32_0 : i32, i32
  }
  func.func @transform_4(%arg0: i32) -> (i32, i32, i32) {
    %c0_i32 = arith.constant 0 : i32
    %c0_i32_0 = arith.constant 0 : i32
    %c0_i32_1 = arith.constant 0 : i32
    return %arg0, %c0_i32, %c0_i32_0 : i32, i32, i32
  }
}

</mosaic_0001>

<llo_original>
// kernel: tpu_custom_call.1
$region0: #{tpu_custom_call.1}
  #allocation0 [shape = 'u32[]', space=smem, size = 0x4, offset = 0x4, fixed_abs, tag = 'smem constant byte address 0x4 - core index']
  #allocation1 [shape = 'u32[144,128]{1,0:T(1,128)}', space=vmem, size = 0x12000, scoped, tag = 'internal scratch']
  #allocation2 [shape = 'f32[1,1]{1,0:T(1,128)S(6)}', space=smem, size = 0x200, scoped, tag = 'scoped memory for tpu_custom_call.1']
  %s0 = inlined_call_operand.hbm [shape: f32[8,32], index: 0, kind: input, shape index: {}]
  %s1 = inlined_call_operand.vmem [shape: f32[16,32], index: 1, kind: input, shape index: {}]
  %s2 = inlined_call_operand.vmem [shape: f32[16,1], index: 2, kind: input, shape index: {}]
  %s3 = inlined_call_operand.<no memory space> [shape: f32[1,1], index: 3, kind: input, shape index: {}]
  %s4 = inlined_call_operand.hbm [shape: f32[1,1,128], index: 4, kind: output, shape index: {}]
  %s5 = sld [smem:[#allocation0]]
  $region30: #{tpu_custom_call.1} parent=0
    _
  %s7 = ssub.s32 1, %s5
  %s8 = scalar_select 0, %s7, %s5
  %9 = sst [smem:[#allocation2]] %s3
  $region1: #{tpu_custom_call.1} parent=0
    #allocation3 [shape = 'u8[65536]{0}', space=vmem, size = 0x10000, scoped, tag = 'input window, operand 0, single buffered']
    #allocation4 [shape = 's32[1]{0}', space=sflag, size = 0x4, scoped, tag = 'scoped memory for tpu_custom_call.1']
    #allocation5 [shape = 's32[1]{0}', space=sflag, size = 0x4, scoped, tag = 'scoped memory for tpu_custom_call.1']
    #allocation6 [shape = 'u8[512]{0}', space=vmem, size = 0x400, scoped, tag = 'output window, operand 0, single buffered']
    %10 = vsyncpa [#allocation4], 0
    %11 = vsyncpa [#allocation5], 0
    // Predicated region
    $region2: #{tpu_custom_call.1} parent=1 // pred_check
      _
    $region3: #{tpu_custom_call.1} parent=1 // pred_check_branch
      %13 = sbr.rel (0) target = $region5
    $region4: #{tpu_custom_call.1} parent=1 // pred_region
      %s15 = ssub.s32 2048, 128
      %16 = vsyncadd [#allocation4], %s15
      %s17 = sshll.u32 [#allocation3], 4
      %s18 = int_to_ptr.vmem [resolvable:$true] %s17
      %23 = dma.hbm_to_vmem [thread:$0]  %s0, 128, %s18, [#allocation4], 128, 128, 8
    $region5: #{tpu_custom_call.1} parent=1 // pred_fallthru
      _
    // Predicated region
    $region6: #{tpu_custom_call.1} parent=1 // pred_check
      _
    $region7: #{tpu_custom_call.1} parent=1 // pred_check_branch
      %25 = sbr.rel (0) target = $region9
    $region8: #{tpu_custom_call.1} parent=1 // pred_region
      _
    $region9: #{tpu_custom_call.1} parent=1 // pred_fallthru
      _
    // Predicated region
    $region10: #{tpu_custom_call.1} parent=1 // pred_check
      _
    $region11: #{tpu_custom_call.1} parent=1 // pred_check_branch
      %27 = sbr.rel (0) target = $region13
    $region12: #{tpu_custom_call.1} parent=1 // pred_region
      _
    $region13: #{tpu_custom_call.1} parent=1 // pred_fallthru
      _
    // Predicated region
    $region14: #{tpu_custom_call.1} parent=1 // pred_check
      _
    $region15: #{tpu_custom_call.1} parent=1 // pred_check_branch
      %29 = sbr.rel (0) target = $region17
    $region16: #{tpu_custom_call.1} parent=1 // pred_region
      _
    $region17: #{tpu_custom_call.1} parent=1 // pred_fallthru
      _
    // Predicated region
    $region18: #{tpu_custom_call.1} parent=1 // pred_check
      _
    $region19: #{tpu_custom_call.1} parent=1 // pred_check_branch
      %31 = sbr.rel (0) target = $region21
    $region20: #{tpu_custom_call.1} parent=1 // pred_region
      %32 = dma.done [#allocation4], 2048
    $region21: #{tpu_custom_call.1} parent=1 // pred_fallthru
      _
    %v33 = vld [vmem:[#allocation3] sm:$0xff]
    %v34 = vld [vmem:[#allocation3 + $0x8] sm:$0xff]
    %v35 = vld [vmem:[#allocation3 + $0x10] sm:$0xff]
    %v36 = vld [vmem:[#allocation3 + $0x18] sm:$0xff]
    %v37 = vld [vmem:[#allocation3 + $0x20] sm:$0xff]
    %v38 = vld [vmem:[#allocation3 + $0x28] sm:$0xff]
    %v39 = vld [vmem:[#allocation3 + $0x30] sm:$0xff]
    %v40 = vld [vmem:[#allocation3 + $0x38] sm:$0xff]
    %v41 = vld [vmem:[#allocation3 + $0x40] sm:$0xff]
    %v42 = vld [vmem:[#allocation3 + $0x48] sm:$0xff]
    %v43 = vld [vmem:[#allocation3 + $0x50] sm:$0xff]
    %v44 = vld [vmem:[#allocation3 + $0x58] sm:$0xff]
    %v45 = vld [vmem:[#allocation3 + $0x60] sm:$0xff]
    %v46 = vld [vmem:[#allocation3 + $0x68] sm:$0xff]
    %v47 = vld [vmem:[#allocation3 + $0x70] sm:$0xff]
    %v48 = vld [vmem:[#allocation3 + $0x78] sm:$0xff]
    %v49 = vld [vmem:[%s1] sm:$0xff]
    %v50 = vld [vmem:[%s1 + $0x8] sm:$0xff]
    %vm51 = vcmask 261120
    %v53 = vsel %vm51, %v49, 0
    %v56 = vsel %vm51, %v50, 0
    %v59 = vsel %vm51, %v33, 0
    %v62 = vsel %vm51, %v34, 0
    %v65 = vsel %vm51, %v35, 0
    %v68 = vsel %vm51, %v36, 0
    %v71 = vsel %vm51, %v37, 0
    %v74 = vsel %vm51, %v38, 0
    %v77 = vsel %vm51, %v39, 0
    %v80 = vsel %vm51, %v40, 0
    %v83 = vsel %vm51, %v41, 0
    %v86 = vsel %vm51, %v42, 0
    %v89 = vsel %vm51, %v43, 0
    %v92 = vsel %vm51, %v44, 0
    %v95 = vsel %vm51, %v45, 0
    %v98 = vsel %vm51, %v46, 0
    %v101 = vsel %vm51, %v47, 0
    %v104 = vsel %vm51, %v48, 0
    %106 = vmatprep.subr.mxu0 0.0
    %107 = vmatpush1.xpose.msra.mxu0 %v104
    %108 = vmatprep.subr.mxu0 0.0
    %109 = vmatpush1.xpose.msra.mxu0 %v101
    %110 = vmatprep.subr.mxu0 0.0
    %111 = vmatpush1.xpose.msra.mxu0 %v98
    %112 = vmatprep.subr.mxu0 0.0
    %113 = vmatpush1.xpose.msra.mxu0 %v95
    %114 = vmatprep.subr.mxu0 0.0
    %115 = vmatpush1.xpose.msra.mxu0 %v92
    %116 = vmatprep.subr.mxu0 0.0
    %117 = vmatpush1.xpose.msra.mxu0 %v89
    %118 = vmatprep.subr.mxu0 0.0
    %119 = vmatpush1.xpose.msra.mxu0 %v86
    %120 = vmatprep.subr.mxu0 0.0
    %121 = vmatpush1.xpose.msra.mxu0 %v83
    %122 = vmatprep.subr.mxu0 0.0
    %123 = vmatpush1.xpose.msra.mxu0 %v80
    %124 = vmatprep.subr.mxu0 0.0
    %125 = vmatpush1.xpose.msra.mxu0 %v77
    %126 = vmatprep.subr.mxu0 0.0
    %127 = vmatpush1.xpose.msra.mxu0 %v74
    %128 = vmatprep.subr.mxu0 0.0
    %129 = vmatpush1.xpose.msra.mxu0 %v71
    %130 = vmatprep.subr.mxu0 0.0
    %131 = vmatpush1.xpose.msra.mxu0 %v68
    %132 = vmatprep.subr.mxu0 0.0
    %133 = vmatpush1.xpose.msra.mxu0 %v65
    %134 = vmatprep.subr.mxu0 0.0
    %135 = vmatpush1.xpose.msra.mxu0 %v62
    %136 = vmatprep.subr.mxu0 0.0
    %137 = vmatpush1.xpose.msra.mxu0 %v59
    %138 = vmatprep.subr.mxu0 0.0
    %139 = vmatpush2.xpose.msra.mxu0 0.0
    %140 = vmatprep.subr.mxu0 0.0
    %141 = vmatpush2.xpose.msra.mxu0 0.0
    %142 = vmatprep.subr.mxu0 0.0
    %143 = vmatpush2.xpose.msra.mxu0 0.0
    %144 = vmatprep.subr.mxu0 0.0
    %145 = vmatpush2.xpose.msra.mxu0 0.0
    %146 = vmatprep.subr.mxu0 0.0
    %147 = vmatpush2.xpose.msra.mxu0 0.0
    %148 = vmatprep.subr.mxu0 0.0
    %149 = vmatpush2.xpose.msra.mxu0 0.0
    %150 = vmatprep.subr.mxu0 0.0
    %151 = vmatpush2.xpose.msra.mxu0 0.0
    %152 = vmatprep.subr.mxu0 0.0
    %153 = vmatpush2.xpose.msra.mxu0 0.0
    %154 = vmatprep.subr.mxu0 0.0
    %155 = vmatpush2.xpose.msra.mxu0 0.0
    %156 = vmatprep.subr.mxu0 0.0
    %157 = vmatpush2.xpose.msra.mxu0 0.0
    %158 = vmatprep.subr.mxu0 0.0
    %159 = vmatpush2.xpose.msra.mxu0 0.0
    %160 = vmatprep.subr.mxu0 0.0
    %161 = vmatpush2.xpose.msra.mxu0 0.0
    %162 = vmatprep.subr.mxu0 0.0
    %163 = vmatpush2.xpose.msra.mxu0 0.0
    %164 = vmatprep.subr.mxu0 0.0
    %165 = vmatpush2.xpose.msra.mxu0 0.0
    %166 = vmatprep.subr.mxu0 0.0
    %167 = vmatpush2.xpose.msra.mxu0 0.0
    %168 = vmatprep.subr.mxu0 0.0
    %169 = vmatpush2.xpose.msra.mxu0 0.0
    %170 = vmatprep.mubr.f32.mxu0 0.0
    %171 = vmatmul.mubr.f32.gmra.mxu0 %v53
    %v172 = vpop.f32.mrf.mxu0
    %v173 = vadd.f32 0.0, %v172
    %v174 = vpop.f32.mrf.mxu0
    %175 = vmatprep.mubr.f32.mxu0 0.0
    %176 = vmatmul.mubr.f32.gmra.mxu0 %v56
    %v177 = vpop.f32.mrf.mxu0
    %v178 = vadd.f32 0.0, %v177
    %v179 = vpop.f32.mrf.mxu0
    %180 = vdwg.mxu0
    %v181 = vld [vmem:[%s2] sm:$0xff]
    %v182 = vld [vmem:[%s2 + $0x8] sm:$0xff]
    %184 = vset.pattern.permute.xlu0 0
    %185 = vperm.xlu0 %184, %v181
    %v186 = vpop.permute.xlu0 %185
    %189 = vset.pattern.permute.xlu0 0
    %190 = vperm.xlu0 %189, %v182
    %v191 = vpop.permute.xlu0 %190
    %v193 = vmul.f32 %v173, %v186
    %v194 = vmul.f32 %v178, %v191
    %v195 = vadd.f32 %v193, %v194
    %v196 = vrot.slane %v195, 4
    %v197 = vadd.f32 %v195, %v196
    %v198 = vrot.slane %v197, 2
    %v199 = vadd.f32 %v197, %v198
    %v200 = vrot.slane %v199, 1
    %v201 = vadd.f32 %v199, %v200
    %s202 = sld [smem:[#allocation2]]
    %v203 = vstv %s202
    %v204 = vadd.f32 %v201, %v203
    %v205 = vxor.u32 %v204, 2147483648
    %v206 = vmul.f32 %v205, 1.442695
    %v207 = vpow.pop %v206
    %v208 = vadd.f32 %v207, 1.0
    %v209 = vrcp.pop %v208
    %v210 = vmul.f32 1.0, %v209
    %211 = vst [vmem:[#allocation6] sm:$0x1] %v210
    // Predicated region
    $region22: #{tpu_custom_call.1} parent=1 // pred_check
      _
    $region23: #{tpu_custom_call.1} parent=1 // pred_check_branch
      %213 = sbr.rel (0) target = $region25
    $region24: #{tpu_custom_call.1} parent=1 // pred_region
      %s215 = ssub.s32 16, 16
      %216 = vsyncadd [#allocation5], %s215
      %s218 = sshll.u32 [#allocation6], 4
      %s219 = int_to_ptr.vmem [resolvable:$true] %s218
      %221 = dma.vmem_to_hbm [thread:$0]  %s219, 16, %s4, [#allocation5]
    $region25: #{tpu_custom_call.1} parent=1 // pred_fallthru
      _
    // Predicated region
    $region26: #{tpu_custom_call.1} parent=1 // pred_check
      _
    $region27: #{tpu_custom_call.1} parent=1 // pred_check_branch
      %223 = sbr.rel (0) target = $region29
    $region28: #{tpu_custom_call.1} parent=1 // pred_region
      %224 = dma.done [#allocation5], 16
    $region29: #{tpu_custom_call.1} parent=1 // pred_fallthru
      _
    %225 = vsyncpa [#allocation4], 1
    %226 = vsyncpa [#allocation5], 1

</llo_original>
